<compile_context>
chip_gen: v5e
topology: v5e:2x2
jax: 0.10.0
libtpu: 0.0.40
codegen_flags: <defaults>
</compile_context>

<pallas_src>
import functools

import jax
import jax.numpy as jnp
from jax.experimental import pallas as pl
from jax.experimental.pallas import tpu as pltpu


# ----------------------------------------------------------------------------
# Pallas kernel: out = x @ w_eff + bias   (f32 MXU accumulation via scratch)
# ----------------------------------------------------------------------------
def _fused_linear_kernel(x_ref, w_ref, b_ref, o_ref, acc_ref):
    k = pl.program_id(2)

    @pl.when(k == 0)
    def _():
        acc_ref[...] = jnp.zeros_like(acc_ref)

    acc_ref[...] += jnp.dot(x_ref[...], w_ref[...],
                            preferred_element_type=jnp.float32)

    @pl.when(k == pl.num_programs(2) - 1)
    def _():
        o_ref[...] = (acc_ref[...] + b_ref[...].astype(jnp.float32)).astype(o_ref.dtype)


def _round_up(x, m):
    return (x + m - 1) // m * m


def _pick_tiles(M, N, K):
    # tm decoupled from B*S (cap 256, multiple of 8); big K/N tiles to feed the
    # 256-wide MXUs and cut grid-step overhead.
    tm = min(256, _round_up(M, 8))
    tn = min(512, _round_up(N, 128))
    tk = min(512, _round_up(K, 128))
    # If the M axis collapses to one block (small batch / decode), split N into
    # >=2 blocks so both v7x TensorCores get work.
    if _round_up(M, tm) // tm == 1 and _round_up(N, tn) // tn == 1 and N > 128:
        tn = _round_up(max(128, _round_up(N, 128) // 2), 128)
    return tm, tn, tk


def fused_linear(x2d, w_eff, bias):
    """out[M, N] = x2d[M, K] @ w_eff[K, N] + bias[N], padded to tile multiples."""
    M, K = x2d.shape
    _, N = w_eff.shape
    tm, tn, tk = _pick_tiles(M, N, K)
    Mp, Np, Kp = _round_up(M, tm), _round_up(N, tn), _round_up(K, tk)

    xp = jnp.pad(x2d, ((0, Mp - M), (0, Kp - K))) if (Mp != M or Kp != K) else x2d
    wp = jnp.pad(w_eff, ((0, Kp - K), (0, Np - N))) if (Kp != K or Np != N) else w_eff
    bp = (jnp.pad(bias, (0, Np - N)) if Np != N else bias).reshape(1, Np)

    out = pl.pallas_call(
        _fused_linear_kernel,
        out_shape=jax.ShapeDtypeStruct((Mp, Np), x2d.dtype),
        grid_spec=pltpu.PrefetchScalarGridSpec(
            num_scalar_prefetch=0,
            grid=(Mp // tm, Np // tn, Kp // tk),
            in_specs=[
                pl.BlockSpec((tm, tk), lambda i, j, k: (i, k)),   # x
                pl.BlockSpec((tk, tn), lambda i, j, k: (k, j)),   # w_eff (= W^T + delta_w)
                pl.BlockSpec((1, tn), lambda i, j, k: (0, j)),    # bias
            ],
            out_specs=pl.BlockSpec((tm, tn), lambda i, j, k: (i, j)),
            scratch_shapes=[pltpu.VMEM((tm, tn), jnp.float32)],
        ),
        compiler_params=pltpu.CompilerParams(
            dimension_semantics=("parallel", "parallel", "arbitrary"),
            vmem_limit_bytes=48 * 1024 * 1024,   # safe on v7x (64 MiB), > 32 MiB default
        ),
    )(xp, wp, bp)

    if Mp != M or Np != N:
        out = out[:M, :N]
    return out


# ----------------------------------------------------------------------------
# Adapter delta-weight construction (parameter setup, plain JAX glue)
#
# forward(): dense_s[indices[0], indices[1]] = spectrum   (in_features x in_features)
#            delta_w = idwt2(dense_s) * scale
# idwt2 pads the single channel to 4 (LL = dense_s, LH = HL = HH = 0) and applies
# HaarInverse (alpha = 0.5); with the high-frequency bands zero this is exactly a
# 2x nearest-neighbor upsample of dense_s scaled by 0.5.  Only the [:K, :N] slab
# is contracted against, so we upsample only the sub-block that feeds it.
# ----------------------------------------------------------------------------
def make_delta_w(spectrum, indices, in_features, out_features, scale):
    dense_s = jnp.zeros((in_features, in_features), spectrum.dtype)
    dense_s = dense_s.at[indices[0], indices[1]].set(spectrum)
    rows = -(-in_features // 2)
    cols = -(-out_features // 2)
    up = jnp.repeat(jnp.repeat(dense_s[:rows, :cols], 2, axis=0), 2, axis=1)
    # TODO(synk): the original einsum 'ijk,kl->ijl' is shape-inconsistent (idwt2 output
    # is [2*in, 2*in] but the contraction needs first dim == in_features); we take the
    # [:in_features, :out_features] slab (requires out_features <= 2*in_features) to
    # make the adapter contribution well-defined.
    return up[:in_features, :out_features] * (0.5 * scale)


@jax.jit
def fourier_linear_forward(x, weight, bias, spectrum, indices, scale):
    """Replicates Linear.forward: result = base_layer(x) + einsum('ijk,kl->ijl', x, delta_w)."""
    B, S, K = x.shape
    N = weight.shape[0]
    previous_dtype = x.dtype
    compute_dtype = spectrum.dtype  # module casts x / delta_w to the spectrum dtype

    delta_w = make_delta_w(spectrum, indices, K, N, scale)
    # Fold the adapter into the base weight once: a single elementwise pass here
    # instead of streaming two [K, N] matrices through HBM inside the kernel.
    # TODO(synk): if base weights are static across calls, cache w_eff outside the forward.
    w_eff = weight.T.astype(compute_dtype) + delta_w.astype(compute_dtype)

    out2d = fused_linear(
        x.reshape(B * S, K).astype(compute_dtype),
        w_eff,
        bias.astype(compute_dtype),
    )
    return out2d.reshape(B, S, N).astype(previous_dtype)


if __name__ == "__main__":
    # small shapes consistent with the module: x [B, S, in_features]
    B, S = 2, 8
    in_features, out_features = 256, 256
    n_frequency, scale = 128, 0.1

    key = jax.random.PRNGKey(0)
    kx, kw, kb, ks, ki = jax.random.split(key, 5)

    x = jax.random.normal(kx, (B, S, in_features), dtype=jnp.float32)
    # base nn.Linear parameters: weight [out, in], bias [out]
    weight = jax.random.normal(kw, (out_features, in_features), dtype=jnp.float32) * 0.02
    bias = jax.random.normal(kb, (out_features,), dtype=jnp.float32) * 0.02
    # adapter parameters: spectrum [n_frequency], indices = flat randperm -> (row, col)
    spectrum = jax.random.normal(ks, (n_frequency,), dtype=jnp.float32)
    flat_idx = jax.random.permutation(ki, in_features * in_features)[:n_frequency]
    indices = jnp.stack([flat_idx // in_features, flat_idx % in_features], axis=0)

    result = fourier_linear_forward(x, weight, bias, spectrum, indices, scale)
    result = jax.block_until_ready(result)

    # pure-JAX reference (full upsample + slice, matching the original definition)
    dense_s_ref = jnp.zeros((in_features, in_features), spectrum.dtype)
    dense_s_ref = dense_s_ref.at[indices[0], indices[1]].set(spectrum)
    up_ref = jnp.repeat(jnp.repeat(dense_s_ref, 2, axis=0), 2, axis=1) * 0.5
    delta_w_ref = up_ref[:in_features, :out_features] * scale
    ref = (jnp.einsum("bsk,nk->bsn", x, weight) + bias
           + jnp.einsum("bsk,kn->bsn", x, delta_w_ref))

    assert result.shape == (B, S, out_features)
    assert jnp.allclose(result, ref, atol=1e-4, rtol=1e-4), "mismatch vs reference"

    print("KERNEL_OK")
</pallas_src>

<mosaic_0001>
module attributes {stable_mosaic.version = 11 : i64} {
  func.func @_fused_linear_kernel(%arg0: i32, %arg1: i32, %arg2: i32, %arg3: memref<16x256xf32, #tpu.memory_space<vmem>>, %arg4: memref<256x128xf32, #tpu.memory_space<vmem>>, %arg5: memref<1x128xf32, #tpu.memory_space<vmem>>, %arg6: memref<16x128xf32, #tpu.memory_space<vmem>>, %arg7: memref<16x128xf32, #tpu.memory_space<vmem>>) attributes {dimension_semantics = [#tpu.dimension_semantics<parallel>, #tpu.dimension_semantics<parallel>, #tpu.dimension_semantics<arbitrary>], iteration_bounds = array<i64: 1, 2, 1>, scalar_prefetch = 0 : i64, scratch_operands = 1 : i64, tpu.core_type = #tpu.core_type<tc>, window_params = [{transform_indices = @transform_0, window_bounds = array<i64: 16, 256>}, {transform_indices = @transform_1, window_bounds = array<i64: 256, 128>}, {transform_indices = @transform_2, window_bounds = array<i64: 1, 128>}, {transform_indices = @transform_3, window_bounds = array<i64: 16, 128>}]} {
    %c0_i32 = arith.constant 0 : i32
    %0 = arith.cmpi eq, %arg2, %c0_i32 : i32
    %1 = arith.extui %0 : i1 to i32
    %c0_i32_0 = arith.constant 0 : i32
    %2 = arith.cmpi ne, %1, %c0_i32_0 : i32
    scf.if %2 {
      %cst_10 = arith.constant 0.000000e+00 : f32
      %12 = vector.broadcast %cst_10 : f32 to vector<16x128xf32>
      %c0_11 = arith.constant 0 : index
      %c0_12 = arith.constant 0 : index
      %13 = vector.load %arg7[%c0_11, %c0_12] : memref<16x128xf32, #tpu.memory_space<vmem>>, vector<16x128xf32>
      tpu.vector_store %arg7[%c0_11, %c0_12], %12 {strides = array<i32>} : memref<16x128xf32, #tpu.memory_space<vmem>>, vector<16x128xf32>,
    } else {
    }
    %c0 = arith.constant 0 : index
    %c0_1 = arith.constant 0 : index
    %3 = vector.load %arg7[%c0, %c0_1] : memref<16x128xf32, #tpu.memory_space<vmem>>, vector<16x128xf32>
    %c0_2 = arith.constant 0 : index
    %c0_3 = arith.constant 0 : index
    %4 = vector.load %arg3[%c0_2, %c0_3] : memref<16x256xf32, #tpu.memory_space<vmem>>, vector<16x256xf32>
    %c0_4 = arith.constant 0 : index
    %c0_5 = arith.constant 0 : index
    %5 = vector.load %arg4[%c0_4, %c0_5] : memref<256x128xf32, #tpu.memory_space<vmem>>, vector<256x128xf32>
    %cst = arith.constant dense<0.000000e+00> : vector<16x128xf32>
    %6 = tpu.matmul %4, %5, %cst {dimension_numbers = #tpu.dot_dimension_numbers<[1], [0], [0], [1], [0, 0, 1, 1], [], []>} : vector<16x256xf32>, vector<256x128xf32>, vector<16x128xf32> -> vector<16x128xf32>
    %7 = arith.addf %3, %6 : vector<16x128xf32>
    %c0_6 = arith.constant 0 : index
    %c0_7 = arith.constant 0 : index
    %8 = vector.load %arg7[%c0_6, %c0_7] : memref<16x128xf32, #tpu.memory_space<vmem>>, vector<16x128xf32>
    tpu.vector_store %arg7[%c0_6, %c0_7], %7 {strides = array<i32>} : memref<16x128xf32, #tpu.memory_space<vmem>>, vector<16x128xf32>,
    %c0_i32_8 = arith.constant 0 : i32
    %9 = arith.cmpi eq, %arg2, %c0_i32_8 : i32
    %10 = arith.extui %9 : i1 to i32
    %c0_i32_9 = arith.constant 0 : i32
    %11 = arith.cmpi ne, %10, %c0_i32_9 : i32
    scf.if %11 {
      %c0_10 = arith.constant 0 : index
      %c0_11 = arith.constant 0 : index
      %12 = vector.load %arg7[%c0_10, %c0_11] : memref<16x128xf32, #tpu.memory_space<vmem>>, vector<16x128xf32>
      %c0_12 = arith.constant 0 : index
      %c0_13 = arith.constant 0 : index
      %13 = vector.load %arg5[%c0_12, %c0_13] : memref<1x128xf32, #tpu.memory_space<vmem>>, vector<1x128xf32>
      %14 = vector.broadcast %13 : vector<1x128xf32> to vector<16x128xf32>
      %15 = arith.addf %12, %14 : vector<16x128xf32>
      %c0_14 = arith.constant 0 : index
      %c0_15 = arith.constant 0 : index
      %16 = vector.load %arg6[%c0_14, %c0_15] : memref<16x128xf32, #tpu.memory_space<vmem>>, vector<16x128xf32>
      tpu.vector_store %arg6[%c0_14, %c0_15], %15 {strides = array<i32>} : memref<16x128xf32, #tpu.memory_space<vmem>>, vector<16x128xf32>,
    } else {
    }
    return
  }
  func.func @transform_0(%arg0: i32, %arg1: i32, %arg2: i32) -> (i32, i32) {
    %c0_i32 = arith.constant 0 : i32
    return %arg0, %arg2 : i32, i32
  }
  func.func @transform_1(%arg0: i32, %arg1: i32, %arg2: i32) -> (i32, i32) {
    %c0_i32 = arith.constant 0 : i32
    return %arg2, %arg1 : i32, i32
  }
  func.func @transform_2(%arg0: i32, %arg1: i32, %arg2: i32) -> (i32, i32) {
    %c0_i32 = arith.constant 0 : i32
    %c0_i32_0 = arith.constant 0 : i32
    return %c0_i32, %arg1 : i32, i32
  }
  func.func @transform_3(%arg0: i32, %arg1: i32, %arg2: i32) -> (i32, i32) {
    %c0_i32 = arith.constant 0 : i32
    return %arg0, %arg1 : i32, i32
  }
}

</mosaic_0001>

<llo_original>
// kernel: fourier_linear_forward.1
$region0: #{fourier_linear_forward.1}
  #allocation0 [shape = 'u32[]', space=smem, size = 0x4, offset = 0x4, fixed_abs, tag = 'smem constant byte address 0x4 - core index']
  #allocation1 [shape = 'u32[72,128]{1,0:T(1,128)}', space=vmem, size = 0x9000, scoped, tag = 'internal scratch']
  #allocation2 [shape = 'f32[16,128]{1,0:T(8,128)}', space=vmem, size = 0x2000, scoped, tag = 'scratch operand']
  %s0 = inlined_call_operand.vmem [shape: f32[16,256], index: 0, kind: input, shape index: {}]
  %s1 = inlined_call_operand.vmem [shape: f32[256,256], index: 1, kind: input, shape index: {}]
  %s2 = inlined_call_operand.vmem [shape: f32[1,256], index: 2, kind: input, shape index: {}]
  %s3 = inlined_call_operand.hbm [shape: f32[16,256], index: 3, kind: output, shape index: {}]
  %s4 = sld [smem:[#allocation0]]
  $region91: #{fourier_linear_forward.1} parent=0
    _
  %s6 = ssub.s32 1, %s4
  %s7 = scalar_select 0, %s6, %s4
  $region1: #{fourier_linear_forward.1} parent=0
    #allocation3 [shape = 'u8[262144]{0}', space=vmem, size = 0x40000, scoped, tag = 'input window, operand 1']
    #allocation4 [shape = 'u8[16384]{0}', space=vmem, size = 0x4000, scoped, tag = 'output window, operand 0']
    #allocation5 [shape = 's32[2]{0}', space=sflag, size = 0x8, scoped, tag = 'scoped memory for fourier_linear_forward.1']
    %8 = vsyncpa [#allocation5], 0
    %s9 = scalar_lea.sflag [#allocation5], 1
    %10 = vsyncpa %s9, 0
    loop: start=0, step=1, limit=4
    $region2: #{fourier_linear_forward.1} parent=1 // loop_pre_header
      _
    $region3: #{fourier_linear_forward.1} parent=1 // loop_header
      %s12 = sphi 0, %s16
      %p13 = scmp.ge.s32.totalorder %s12, 4
      %s19 = sphi 0, %s38
      %s20 = sphi 0, %s34
      %s21 = sphi 0, %s30
      %s22 = sphi 0, %s19
      %s23 = sphi 0, %s20
      %s24 = sphi 0, %s21
      %s25 = sphi 0, %s22
      %s26 = sphi 0, %s23
      %s27 = sphi 0, %s24
      %s43 = sphi 0, %s45
      %s46 = sphi 0, %s43
      %s47 = sphi 0, %s46
      %s63 = sphi 0, %s47
      %s71 = sphi 0, %s73
      %s74 = sphi 0, %s71
      %s75 = sphi 0, %s74
      %s91 = sphi 0, %s75
      %s97 = sphi 0, %s99
      %s100 = sphi 0, %s97
      %s101 = sphi 0, %s100
      %s117 = sphi 0, %s101
      %s125 = sphi 0, %s127
      %s128 = sphi 0, %s125
      %s129 = sphi 0, %s128
      %s145 = sphi 0, %s129
    $region4: #{fourier_linear_forward.1} parent=1 // loop_header_branch
      %15 = sbr.rel (%p13) target = $region8
    $region5: #{fourier_linear_forward.1} parent=1 // loop_body
      %s17 = ssub.s32 %s12, 1
      %s18 = ssub.s32 %s12, 2
      %s28 = sadd.s32 1, %s21
      %p29 = scmp.ge.s32.totalorder %s28, 1
      %s30 = scalar_select %p29, 0, %s28
      %s31 = sadd.s32 1, %s20
      %s32 = scalar_select %p29, %s31, %s20
      %p33 = scmp.ge.s32.totalorder %s32, 2
      %s34 = scalar_select %p33, 0, %s32
      %s35 = sadd.s32 1, %s19
      %s36 = scalar_select %p33, %s35, %s19
      %p37 = scmp.ge.s32.totalorder %s36, 1
      %s38 = scalar_select %p37, 0, %s36
      %s39 = ssub.s32 %s19, %s38
      %s40 = ssub.s32 %s21, %s30
      %s41 = sor.u32 %s39, %s40
      %p42 = scmp.eq.s32.totalorder %s41, 0
      %s44 = sadd.s32 %s43, 1
      %s45 = scalar_select %p42, %s43, %s44
      %p48 = pneg %p42
      %p49 = scmp.eq.s32.totalorder %s12, 1
      %p50 = por %p48, %p49
      %p51 = scmp.ne.s32.totalorder %s43, %s46
      %p52 = scmp.eq.s32.totalorder %s12, 0
      %p53 = por %p51, %p52
      %p54 = scmp.ne.s32.totalorder %s43, %s46
      %p55 = scmp.eq.s32.totalorder %s17, 1
      %p56 = por %p54, %p55
      %p57 = scmp.ne.s32.totalorder %s46, %s47
      %p58 = scmp.eq.s32.totalorder %s17, 0
      %p59 = por %p57, %p58
      %p60 = scmp.ne.s32.totalorder %s46, %s47
      %p61 = scmp.eq.s32.totalorder %s18, 1
      %p62 = por %p60, %p61
      %p64 = scmp.ne.s32.totalorder %s47, %s63
      %p65 = scmp.eq.s32.totalorder %s18, 0
      %p66 = por %p64, %p65
      %s67 = ssub.s32 %s21, %s30
      %s68 = ssub.s32 %s20, %s34
      %s69 = sor.u32 %s67, %s68
      %p70 = scmp.eq.s32.totalorder %s69, 0
      %s72 = sadd.s32 %s71, 1
      %s73 = scalar_select %p70, %s71, %s72
      %p76 = pneg %p70
      %p77 = scmp.eq.s32.totalorder %s12, 1
      %p78 = por %p76, %p77
      %p79 = scmp.ne.s32.totalorder %s71, %s74
      %p80 = scmp.eq.s32.totalorder %s12, 0
      %p81 = por %p79, %p80
      %p82 = scmp.ne.s32.totalorder %s71, %s74
      %p83 = scmp.eq.s32.totalorder %s17, 1
      %p84 = por %p82, %p83
      %p85 = scmp.ne.s32.totalorder %s74, %s75
      %p86 = scmp.eq.s32.totalorder %s17, 0
      %p87 = por %p85, %p86
      %p88 = scmp.ne.s32.totalorder %s74, %s75
      %p89 = scmp.eq.s32.totalorder %s18, 1
      %p90 = por %p88, %p89
      %p92 = scmp.ne.s32.totalorder %s75, %s91
      %p93 = scmp.eq.s32.totalorder %s18, 0
      %p94 = por %p92, %p93
      %s95 = ssub.s32 %s20, %s34
      %p96 = scmp.eq.s32.totalorder %s95, 0
      %s98 = sadd.s32 %s97, 1
      %s99 = scalar_select %p96, %s97, %s98
      %p102 = pneg %p96
      %p103 = scmp.eq.s32.totalorder %s12, 1
      %p104 = por %p102, %p103
      %p105 = scmp.ne.s32.totalorder %s97, %s100
      %p106 = scmp.eq.s32.totalorder %s12, 0
      %p107 = por %p105, %p106
      %p108 = scmp.ne.s32.totalorder %s97, %s100
      %p109 = scmp.eq.s32.totalorder %s17, 1
      %p110 = por %p108, %p109
      %p111 = scmp.ne.s32.totalorder %s100, %s101
      %p112 = scmp.eq.s32.totalorder %s17, 0
      %p113 = por %p111, %p112
      %p114 = scmp.ne.s32.totalorder %s100, %s101
      %p115 = scmp.eq.s32.totalorder %s18, 1
      %p116 = por %p114, %p115
      %p118 = scmp.ne.s32.totalorder %s101, %s117
      %p119 = scmp.eq.s32.totalorder %s18, 0
      %p120 = por %p118, %p119
      %s121 = ssub.s32 %s19, %s38
      %s122 = ssub.s32 %s20, %s34
      %s123 = sor.u32 %s121, %s122
      %p124 = scmp.eq.s32.totalorder %s123, 0
      %s126 = sadd.s32 %s125, 1
      %s127 = scalar_select %p124, %s125, %s126
      %p130 = pneg %p124
      %p131 = scmp.eq.s32.totalorder %s12, 1
      %p132 = por %p130, %p131
      %p133 = scmp.ne.s32.totalorder %s125, %s128
      %p134 = scmp.eq.s32.totalorder %s12, 0
      %p135 = por %p133, %p134
      %p136 = scmp.ne.s32.totalorder %s125, %s128
      %p137 = scmp.eq.s32.totalorder %s17, 1
      %p138 = por %p136, %p137
      %p139 = scmp.ne.s32.totalorder %s128, %s129
      %p140 = scmp.eq.s32.totalorder %s17, 0
      %p141 = por %p139, %p140
      %p142 = scmp.ne.s32.totalorder %s128, %s129
      %p143 = scmp.eq.s32.totalorder %s18, 1
      %p144 = por %p142, %p143
      %p146 = scmp.ne.s32.totalorder %s129, %s145
      %p147 = scmp.eq.s32.totalorder %s18, 0
      %p148 = por %p146, %p147
      %p149 = scmp.le.s32.totalorder 1, %s12
      %p150 = scmp.lt.s32.totalorder %s12, 3
      %p151 = pnand %p149, %p150
      %p152 = pneg %p151
      // Predicated region
      $region9: #{fourier_linear_forward.1} parent=5 // pred_check
        _
      $region10: #{fourier_linear_forward.1} parent=5 // pred_check_branch
        %154 = sbr.rel (%p151) target = $region12
      $region11: #{fourier_linear_forward.1} parent=5 // pred_region
        %s155 = ssub.s32 %s12, 1
        // Predicated region
        $region13: #{fourier_linear_forward.1} parent=11 // pred_check
          %p156 = pneg %p59
        $region14: #{fourier_linear_forward.1} parent=11 // pred_check_branch
          %158 = sbr.rel (%p156) target = $region16
        $region15: #{fourier_linear_forward.1} parent=11 // pred_region
          %s159 = smul.u32 2, %s22
          %s160 = smul.u32 2, %s24
          %p161 = scmp.lt.s32.totalorder %s159, 1
          %s162 = scalar_select %p161, %s159, 1
          %p163 = scmp.lt.s32.totalorder %s160, 1
          %s164 = scalar_select %p163, %s160, 1
          %s165 = smul.addr %s162, 2
          %s166 = sadd.s32 %s164, %s165
          %s167 = smul.addr %s166, 8
          %s168 = scalar_lea.vmem %s0, %s167
          %s169 = smul.u32 2, %s22
          %s170 = smul.u32 2, %s24
        $region16: #{fourier_linear_forward.1} parent=11 // pred_fallthru
          _
      $region12: #{fourier_linear_forward.1} parent=5 // pred_fallthru
        _
      %p171 = scmp.lt.s32.totalorder %s12, 2
      // Predicated region
      $region17: #{fourier_linear_forward.1} parent=5 // pred_check
        %p172 = pneg %p171
      $region18: #{fourier_linear_forward.1} parent=5 // pred_check_branch
        %174 = sbr.rel (%p172) target = $region20
      $region19: #{fourier_linear_forward.1} parent=5 // pred_region
        // Predicated region
        $region21: #{fourier_linear_forward.1} parent=19 // pred_check
          %p175 = pneg %p81
        $region22: #{fourier_linear_forward.1} parent=19 // pred_check_branch
          %177 = sbr.rel (%p175) target = $region24
        $region23: #{fourier_linear_forward.1} parent=19 // pred_region
          %s178 = sand.u32 %s71, 1
          %s179 = sand.u32 %s71, 1
          %s180 = smul.addr %s179, 256
          %s181 = scalar_lea.vmem [#allocation3], %s180
          %s182 = smul.u32 32, %s21
          %s183 = smul.addr %s182, 2
          %s184 = sadd.s32 %s20, %s183
          %s185 = smul.addr %s184, 8
          %s186 = scalar_lea.vmem %s1, %s185
          // Predicated region
          $region25: #{fourier_linear_forward.1} parent=23 // pred_check
            _
          $region26: #{fourier_linear_forward.1} parent=23 // pred_check_branch
            %188 = sbr.rel (0) target = $region28
          $region27: #{fourier_linear_forward.1} parent=23 // pred_region
            // Predicated region
            $region29: #{fourier_linear_forward.1} parent=27 // pred_check
              _
            $region30: #{fourier_linear_forward.1} parent=27 // pred_check_branch
              %190 = sbr.rel (0) target = $region32
            $region31: #{fourier_linear_forward.1} parent=27 // pred_region
              // Predicated region
              $region44: #{fourier_linear_forward.1} parent=31 // pred_check
                _
              $region45: #{fourier_linear_forward.1} parent=31 // pred_check_branch
                %268 = sbr.rel (0) target = $region47
              $region46: #{fourier_linear_forward.1} parent=31 // pred_region
                loop: start=0, step=1, limit=1
                $region48: #{fourier_linear_forward.1} parent=46 // loop_pre_header
                  _
                $region49: #{fourier_linear_forward.1} parent=46 // loop_header
                  %s270 = sphi 0, %s274
                  %p271 = scmp.ge.s32.totalorder %s270, 1
                  %s275 = sphi %s186, %s186
                  %s276 = sphi %s181, %s181
                $region50: #{fourier_linear_forward.1} parent=46 // loop_header_branch
                  %273 = sbr.rel (%p271) target = $region54
                $region51: #{fourier_linear_forward.1} parent=46 // loop_body
                  %v277 = vld [vmem:[%s275] sm:$0xff]
                  %278 = vst [vmem:[%s276] sm:$0xff] %v277
                  %v279 = vld [vmem:[%s275 + $0x10] sm:$0xff]
                  %280 = vst [vmem:[%s276 + $0x8] sm:$0xff] %v279
                  %v281 = vld [vmem:[%s275 + $0x20] sm:$0xff]
                  %282 = vst [vmem:[%s276 + $0x10] sm:$0xff] %v281
                  %v283 = vld [vmem:[%s275 + $0x30] sm:$0xff]
                  %284 = vst [vmem:[%s276 + $0x18] sm:$0xff] %v283
                  %v285 = vld [vmem:[%s275 + $0x40] sm:$0xff]
                  %286 = vst [vmem:[%s276 + $0x20] sm:$0xff] %v285
                  %v287 = vld [vmem:[%s275 + $0x50] sm:$0xff]
                  %288 = vst [vmem:[%s276 + $0x28] sm:$0xff] %v287
                  %v289 = vld [vmem:[%s275 + $0x60] sm:$0xff]
                  %290 = vst [vmem:[%s276 + $0x30] sm:$0xff] %v289
                  %v291 = vld [vmem:[%s275 + $0x70] sm:$0xff]
                  %292 = vst [vmem:[%s276 + $0x38] sm:$0xff] %v291
                  %v293 = vld [vmem:[%s275 + $0x80] sm:$0xff]
                  %294 = vst [vmem:[%s276 + $0x40] sm:$0xff] %v293
                  %v295 = vld [vmem:[%s275 + $0x90] sm:$0xff]
                  %296 = vst [vmem:[%s276 + $0x48] sm:$0xff] %v295
                  %v297 = vld [vmem:[%s275 + $0xa0] sm:$0xff]
                  %298 = vst [vmem:[%s276 + $0x50] sm:$0xff] %v297
                  %v299 = vld [vmem:[%s275 + $0xb0] sm:$0xff]
                  %300 = vst [vmem:[%s276 + $0x58] sm:$0xff] %v299
                  %v301 = vld [vmem:[%s275 + $0xc0] sm:$0xff]
                  %302 = vst [vmem:[%s276 + $0x60] sm:$0xff] %v301
                  %v303 = vld [vmem:[%s275 + $0xd0] sm:$0xff]
                  %304 = vst [vmem:[%s276 + $0x68] sm:$0xff] %v303
                  %v305 = vld [vmem:[%s275 + $0xe0] sm:$0xff]
                  %306 = vst [vmem:[%s276 + $0x70] sm:$0xff] %v305
                  %v307 = vld [vmem:[%s275 + $0xf0] sm:$0xff]
                  %308 = vst [vmem:[%s276 + $0x78] sm:$0xff] %v307
                  %v309 = vld [vmem:[%s275 + $0x100] sm:$0xff]
                  %310 = vst [vmem:[%s276 + $0x80] sm:$0xff] %v309
                  %v311 = vld [vmem:[%s275 + $0x110] sm:$0xff]
                  %312 = vst [vmem:[%s276 + $0x88] sm:$0xff] %v311
                  %v313 = vld [vmem:[%s275 + $0x120] sm:$0xff]
                  %314 = vst [vmem:[%s276 + $0x90] sm:$0xff] %v313
                  %v315 = vld [vmem:[%s275 + $0x130] sm:$0xff]
                  %316 = vst [vmem:[%s276 + $0x98] sm:$0xff] %v315
                  %v317 = vld [vmem:[%s275 + $0x140] sm:$0xff]
                  %318 = vst [vmem:[%s276 + $0xa0] sm:$0xff] %v317
                  %v319 = vld [vmem:[%s275 + $0x150] sm:$0xff]
                  %320 = vst [vmem:[%s276 + $0xa8] sm:$0xff] %v319
                  %v321 = vld [vmem:[%s275 + $0x160] sm:$0xff]
                  %322 = vst [vmem:[%s276 + $0xb0] sm:$0xff] %v321
                  %v323 = vld [vmem:[%s275 + $0x170] sm:$0xff]
                  %324 = vst [vmem:[%s276 + $0xb8] sm:$0xff] %v323
                  %v325 = vld [vmem:[%s275 + $0x180] sm:$0xff]
                  %326 = vst [vmem:[%s276 + $0xc0] sm:$0xff] %v325
                  %v327 = vld [vmem:[%s275 + $0x190] sm:$0xff]
                  %328 = vst [vmem:[%s276 + $0xc8] sm:$0xff] %v327
                  %v329 = vld [vmem:[%s275 + $0x1a0] sm:$0xff]
                  %330 = vst [vmem:[%s276 + $0xd0] sm:$0xff] %v329
                  %v331 = vld [vmem:[%s275 + $0x1b0] sm:$0xff]
                  %332 = vst [vmem:[%s276 + $0xd8] sm:$0xff] %v331
                  %v333 = vld [vmem:[%s275 + $0x1c0] sm:$0xff]
                  %334 = vst [vmem:[%s276 + $0xe0] sm:$0xff] %v333
                  %v335 = vld [vmem:[%s275 + $0x1d0] sm:$0xff]
                  %336 = vst [vmem:[%s276 + $0xe8] sm:$0xff] %v335
                  %v337 = vld [vmem:[%s275 + $0x1e0] sm:$0xff]
                  %338 = vst [vmem:[%s276 + $0xf0] sm:$0xff] %v337
                  %v339 = vld [vmem:[%s275 + $0x1f0] sm:$0xff]
                  %340 = vst [vmem:[%s276 + $0xf8] sm:$0xff] %v339
                $region52: #{fourier_linear_forward.1} parent=46 // loop_footer
                  %s274 = sadd.s32 1, %s270
                $region53: #{fourier_linear_forward.1} parent=46 // loop_footer_branch
                  %269 = sbr.rel target = $region49
                $region54: #{fourier_linear_forward.1} parent=46 // loop_exit
                  _
              $region47: #{fourier_linear_forward.1} parent=31 // pred_fallthru
                _
              // Predicated region
              $region55: #{fourier_linear_forward.1} parent=31 // pred_check
                _
              $region56: #{fourier_linear_forward.1} parent=31 // pred_check_branch
                %342 = sbr.rel target = $region58
              $region57: #{fourier_linear_forward.1} parent=31 // pred_region
                _
              $region58: #{fourier_linear_forward.1} parent=31 // pred_fallthru
                _
            $region32: #{fourier_linear_forward.1} parent=27 // pred_fallthru
              _
            // Predicated region
            $region33: #{fourier_linear_forward.1} parent=27 // pred_check
              _
            $region34: #{fourier_linear_forward.1} parent=27 // pred_check_branch
              %192 = sbr.rel target = $region36
            $region35: #{fourier_linear_forward.1} parent=27 // pred_region
              %s194 = ssub.s32 256, 1
              loop: start=0, step=1, limit=1
              $region37: #{fourier_linear_forward.1} parent=35 // loop_pre_header
                _
              $region38: #{fourier_linear_forward.1} parent=35 // loop_header
                %s196 = sphi 0, %s200
                %p197 = scmp.ge.s32.totalorder %s196, 1
                %s201 = sphi %s186, %s186
                %s202 = sphi %s181, %s181
              $region39: #{fourier_linear_forward.1} parent=35 // loop_header_branch
                %199 = sbr.rel (%p197) target = $region43
              $region40: #{fourier_linear_forward.1} parent=35 // loop_body
                %v203 = vld [vmem:[%s201] sm:%s194]
                %204 = vst [vmem:[%s202] sm:%s194] %v203
                %v205 = vld [vmem:[%s201 + $0x10] sm:%s194]
                %206 = vst [vmem:[%s202 + $0x8] sm:%s194] %v205
                %v207 = vld [vmem:[%s201 + $0x20] sm:%s194]
                %208 = vst [vmem:[%s202 + $0x10] sm:%s194] %v207
                %v209 = vld [vmem:[%s201 + $0x30] sm:%s194]
                %210 = vst [vmem:[%s202 + $0x18] sm:%s194] %v209
                %v211 = vld [vmem:[%s201 + $0x40] sm:%s194]
                %212 = vst [vmem:[%s202 + $0x20] sm:%s194] %v211
                %v213 = vld [vmem:[%s201 + $0x50] sm:%s194]
                %214 = vst [vmem:[%s202 + $0x28] sm:%s194] %v213
                %v215 = vld [vmem:[%s201 + $0x60] sm:%s194]
                %216 = vst [vmem:[%s202 + $0x30] sm:%s194] %v215
                %v217 = vld [vmem:[%s201 + $0x70] sm:%s194]
                %218 = vst [vmem:[%s202 + $0x38] sm:%s194] %v217
                %v219 = vld [vmem:[%s201 + $0x80] sm:%s194]
                %220 = vst [vmem:[%s202 + $0x40] sm:%s194] %v219
                %v221 = vld [vmem:[%s201 + $0x90] sm:%s194]
                %222 = vst [vmem:[%s202 + $0x48] sm:%s194] %v221
                %v223 = vld [vmem:[%s201 + $0xa0] sm:%s194]
                %224 = vst [vmem:[%s202 + $0x50] sm:%s194] %v223
                %v225 = vld [vmem:[%s201 + $0xb0] sm:%s194]
                %226 = vst [vmem:[%s202 + $0x58] sm:%s194] %v225
                %v227 = vld [vmem:[%s201 + $0xc0] sm:%s194]
                %228 = vst [vmem:[%s202 + $0x60] sm:%s194] %v227
                %v229 = vld [vmem:[%s201 + $0xd0] sm:%s194]
                %230 = vst [vmem:[%s202 + $0x68] sm:%s194] %v229
                %v231 = vld [vmem:[%s201 + $0xe0] sm:%s194]
                %232 = vst [vmem:[%s202 + $0x70] sm:%s194] %v231
                %v233 = vld [vmem:[%s201 + $0xf0] sm:%s194]
                %234 = vst [vmem:[%s202 + $0x78] sm:%s194] %v233
                %v235 = vld [vmem:[%s201 + $0x100] sm:%s194]
                %236 = vst [vmem:[%s202 + $0x80] sm:%s194] %v235
                %v237 = vld [vmem:[%s201 + $0x110] sm:%s194]
                %238 = vst [vmem:[%s202 + $0x88] sm:%s194] %v237
                %v239 = vld [vmem:[%s201 + $0x120] sm:%s194]
                %240 = vst [vmem:[%s202 + $0x90] sm:%s194] %v239
                %v241 = vld [vmem:[%s201 + $0x130] sm:%s194]
                %242 = vst [vmem:[%s202 + $0x98] sm:%s194] %v241
                %v243 = vld [vmem:[%s201 + $0x140] sm:%s194]
                %244 = vst [vmem:[%s202 + $0xa0] sm:%s194] %v243
                %v245 = vld [vmem:[%s201 + $0x150] sm:%s194]
                %246 = vst [vmem:[%s202 + $0xa8] sm:%s194] %v245
                %v247 = vld [vmem:[%s201 + $0x160] sm:%s194]
                %248 = vst [vmem:[%s202 + $0xb0] sm:%s194] %v247
                %v249 = vld [vmem:[%s201 + $0x170] sm:%s194]
                %250 = vst [vmem:[%s202 + $0xb8] sm:%s194] %v249
                %v251 = vld [vmem:[%s201 + $0x180] sm:%s194]
                %252 = vst [vmem:[%s202 + $0xc0] sm:%s194] %v251
                %v253 = vld [vmem:[%s201 + $0x190] sm:%s194]
                %254 = vst [vmem:[%s202 + $0xc8] sm:%s194] %v253
                %v255 = vld [vmem:[%s201 + $0x1a0] sm:%s194]
                %256 = vst [vmem:[%s202 + $0xd0] sm:%s194] %v255
                %v257 = vld [vmem:[%s201 + $0x1b0] sm:%s194]
                %258 = vst [vmem:[%s202 + $0xd8] sm:%s194] %v257
                %v259 = vld [vmem:[%s201 + $0x1c0] sm:%s194]
                %260 = vst [vmem:[%s202 + $0xe0] sm:%s194] %v259
                %v261 = vld [vmem:[%s201 + $0x1d0] sm:%s194]
                %262 = vst [vmem:[%s202 + $0xe8] sm:%s194] %v261
                %v263 = vld [vmem:[%s201 + $0x1e0] sm:%s194]
                %264 = vst [vmem:[%s202 + $0xf0] sm:%s194] %v263
                %v265 = vld [vmem:[%s201 + $0x1f0] sm:%s194]
                %266 = vst [vmem:[%s202 + $0xf8] sm:%s194] %v265
              $region41: #{fourier_linear_forward.1} parent=35 // loop_footer
                %s200 = sadd.s32 1, %s196
              $region42: #{fourier_linear_forward.1} parent=35 // loop_footer_branch
                %195 = sbr.rel target = $region38
              $region43: #{fourier_linear_forward.1} parent=35 // loop_exit
                _
            $region36: #{fourier_linear_forward.1} parent=27 // pred_fallthru
              _
          $region28: #{fourier_linear_forward.1} parent=23 // pred_fallthru
            _
          %343 = vnop
        $region24: #{fourier_linear_forward.1} parent=19 // pred_fallthru
          _
        // Predicated region
        $region59: #{fourier_linear_forward.1} parent=19 // pred_check
          %p344 = pneg %p107
        $region60: #{fourier_linear_forward.1} parent=19 // pred_check_branch
          %346 = sbr.rel (%p344) target = $region62
        $region61: #{fourier_linear_forward.1} parent=19 // pred_region
          %p347 = scmp.lt.s32.totalorder %s20, 1
          %s348 = scalar_select %p347, %s20, 1
          %s349 = scalar_lea.vmem %s2, %s348
        $region62: #{fourier_linear_forward.1} parent=19 // pred_fallthru
          _
      $region20: #{fourier_linear_forward.1} parent=5 // pred_fallthru
        _
      %p350 = scmp.le.s32.totalorder 1, %s12
      %p351 = scmp.lt.s32.totalorder %s12, 3
      %p352 = pnand %p350, %p351
      %p353 = pneg %p352
      // Predicated region
      $region63: #{fourier_linear_forward.1} parent=5 // pred_check
        _
      $region64: #{fourier_linear_forward.1} parent=5 // pred_check_branch
        %355 = sbr.rel (%p352) target = $region66
      $region65: #{fourier_linear_forward.1} parent=5 // pred_region
        %s356 = ssub.s32 %s12, 1
        %s357 = sand.u32 %s74, 1
        %s358 = sand.u32 %s74, 1
        %s359 = smul.addr %s358, 256
        %s360 = scalar_lea.vmem [#allocation3], %s359
        // Predicated region
        $region67: #{fourier_linear_forward.1} parent=65 // pred_check
          %p361 = pneg %p87
        $region68: #{fourier_linear_forward.1} parent=65 // pred_check_branch
          %363 = sbr.rel (%p361) target = $region70
        $region69: #{fourier_linear_forward.1} parent=65 // pred_region
          _
        $region70: #{fourier_linear_forward.1} parent=65 // pred_fallthru
          _
        %s364 = smul.u32 2, %s22
        %s365 = smul.u32 2, %s24
        %p366 = scmp.lt.s32.totalorder %s364, 1
        %s367 = scalar_select %p366, %s364, 1
        %p368 = scmp.lt.s32.totalorder %s365, 1
        %s369 = scalar_select %p368, %s365, 1
        %s370 = smul.addr %s367, 2
        %s371 = sadd.s32 %s369, %s370
        %s372 = smul.addr %s371, 8
        %s373 = scalar_lea.vmem %s0, %s372
        %p374 = pneg %p59
        %p375 = pneg %p56
        %s376 = sand.u32 %s74, 1
        %s377 = sand.u32 %s74, 1
        %s378 = smul.addr %s377, 256
        %s379 = scalar_lea.vmem [#allocation3], %s378
        %p380 = pneg %p87
        %p381 = pneg %p84
        %p382 = scmp.lt.s32.totalorder %s23, 1
        %s383 = scalar_select %p382, %s23, 1
        %s384 = scalar_lea.vmem %s2, %s383
        %p385 = pneg %p113
        %p386 = pneg %p110
        %p387 = pneg %p141
        %p388 = pneg %p138
        %s389 = sand.u32 %s128, 1
        %s390 = scalar_lea.sflag [#allocation5], %s389
        %s391 = sand.u32 %s128, 1
        %s392 = smul.addr %s391, 16
        %s393 = scalar_lea.vmem [#allocation4], %s392
        %s394 = smul.u32 2, %s22
        %s395 = smul.u32 2, %s24
        %p396 = scmp.lt.s32.totalorder %s394, 1
        %s397 = scalar_select %p396, %s394, 1
        %p398 = scmp.lt.s32.totalorder %s395, 1
        %s399 = scalar_select %p398, %s395, 1
        %s400 = smul.addr %s397, 2
        %s401 = sadd.s32 %s399, %s400
        %s402 = smul.addr %s401, 8
        %s403 = scalar_lea.vmem %s0, %s402
        %s404 = smul.u32 2, %s22
        %s405 = smul.u32 2, %s24
        %s406 = smul.u32 32, %s24
        %p407 = scmp.lt.s32.totalorder %s23, 1
        %s408 = scalar_select %p407, %s23, 1
        %s409 = scalar_lea.vmem %s2, %s408
        %s410 = smul.u32 2, %s22
        %p411 = scmp.eq.s32.totalorder %s24, 0
        // Predicated region
        $region71: #{fourier_linear_forward.1} parent=65 // pred_check
          %p412 = pneg %p411
        $region72: #{fourier_linear_forward.1} parent=65 // pred_check_branch
          %414 = sbr.rel (%p412) target = $region74
        $region73: #{fourier_linear_forward.1} parent=65 // pred_region
          %415 = vst [vmem:[#allocation2] sm:$0xff] 0.0
          %416 = vst [vmem:[#allocation2 + $0x8] sm:$0xff] 0.0
        $region74: #{fourier_linear_forward.1} parent=65 // pred_fallthru
          _
        %v417 = vld [vmem:[#allocation2] sm:$0xff]
        %v418 = vld [vmem:[#allocation2 + $0x8] sm:$0xff]
        %v419 = vld [vmem:[%s403] sm:$0xff]
        %v420 = vld [vmem:[%s403 + $0x8] sm:$0xff]
        %v421 = vld [vmem:[%s403 + $0x10] sm:$0xff]
        %v422 = vld [vmem:[%s403 + $0x18] sm:$0xff]
        %v423 = vld [vmem:[%s360] sm:$0xff]
        %v424 = vld [vmem:[%s360 + $0x8] sm:$0xff]
        %v425 = vld [vmem:[%s360 + $0x10] sm:$0xff]
        %v426 = vld [vmem:[%s360 + $0x18] sm:$0xff]
        %v427 = vld [vmem:[%s360 + $0x20] sm:$0xff]
        %v428 = vld [vmem:[%s360 + $0x28] sm:$0xff]
        %v429 = vld [vmem:[%s360 + $0x30] sm:$0xff]
        %v430 = vld [vmem:[%s360 + $0x38] sm:$0xff]
        %v431 = vld [vmem:[%s360 + $0x40] sm:$0xff]
        %v432 = vld [vmem:[%s360 + $0x48] sm:$0xff]
        %v433 = vld [vmem:[%s360 + $0x50] sm:$0xff]
        %v434 = vld [vmem:[%s360 + $0x58] sm:$0xff]
        %v435 = vld [vmem:[%s360 + $0x60] sm:$0xff]
        %v436 = vld [vmem:[%s360 + $0x68] sm:$0xff]
        %v437 = vld [vmem:[%s360 + $0x70] sm:$0xff]
        %v438 = vld [vmem:[%s360 + $0x78] sm:$0xff]
        %v439 = vld [vmem:[%s360 + $0x80] sm:$0xff]
        %v440 = vld [vmem:[%s360 + $0x88] sm:$0xff]
        %v441 = vld [vmem:[%s360 + $0x90] sm:$0xff]
        %v442 = vld [vmem:[%s360 + $0x98] sm:$0xff]
        %v443 = vld [vmem:[%s360 + $0xa0] sm:$0xff]
        %v444 = vld [vmem:[%s360 + $0xa8] sm:$0xff]
        %v445 = vld [vmem:[%s360 + $0xb0] sm:$0xff]
        %v446 = vld [vmem:[%s360 + $0xb8] sm:$0xff]
        %v447 = vld [vmem:[%s360 + $0xc0] sm:$0xff]
        %v448 = vld [vmem:[%s360 + $0xc8] sm:$0xff]
        %v449 = vld [vmem:[%s360 + $0xd0] sm:$0xff]
        %v450 = vld [vmem:[%s360 + $0xd8] sm:$0xff]
        %v451 = vld [vmem:[%s360 + $0xe0] sm:$0xff]
        %v452 = vld [vmem:[%s360 + $0xe8] sm:$0xff]
        %v453 = vld [vmem:[%s360 + $0xf0] sm:$0xff]
        %v454 = vld [vmem:[%s360 + $0xf8] sm:$0xff]
        %455 = vmatpush.msra.mxu0 %v438
        %456 = vmatpush.msra.mxu0 %v437
        %457 = vmatpush.msra.mxu0 %v436
        %458 = vmatpush.msra.mxu0 %v435
        %459 = vmatpush.msra.mxu0 %v434
        %460 = vmatpush.msra.mxu0 %v433
        %461 = vmatpush.msra.mxu0 %v432
        %462 = vmatpush.msra.mxu0 %v431
        %463 = vmatpush.msra.mxu0 %v430
        %464 = vmatpush.msra.mxu0 %v429
        %465 = vmatpush.msra.mxu0 %v428
        %466 = vmatpush.msra.mxu0 %v427
        %467 = vmatpush.msra.mxu0 %v426
        %468 = vmatpush.msra.mxu0 %v425
        %469 = vmatpush.msra.mxu0 %v424
        %470 = vmatpush.msra.mxu0 %v423
        %471 = vmatmul.f32.gmra.mxu0 %v419
        %v472 = vpop.f32.mrf.mxu0
        %v473 = vadd.f32 0.0, %v472
        %474 = vmatmul.f32.gmra.mxu0 %v421
        %v475 = vpop.f32.mrf.mxu0
        %v476 = vadd.f32 0.0, %v475
        %477 = vdwg.mxu0
        %478 = vmatpush.msra.mxu0 %v454
        %479 = vmatpush.msra.mxu0 %v453
        %480 = vmatpush.msra.mxu0 %v452
        %481 = vmatpush.msra.mxu0 %v451
        %482 = vmatpush.msra.mxu0 %v450
        %483 = vmatpush.msra.mxu0 %v449
        %484 = vmatpush.msra.mxu0 %v448
        %485 = vmatpush.msra.mxu0 %v447
        %486 = vmatpush.msra.mxu0 %v446
        %487 = vmatpush.msra.mxu0 %v445
        %488 = vmatpush.msra.mxu0 %v444
        %489 = vmatpush.msra.mxu0 %v443
        %490 = vmatpush.msra.mxu0 %v442
        %491 = vmatpush.msra.mxu0 %v441
        %492 = vmatpush.msra.mxu0 %v440
        %493 = vmatpush.msra.mxu0 %v439
        %494 = vmatmul.f32.gmra.mxu0 %v420
        %v495 = vpop.f32.mrf.mxu0
        %v496 = vadd.f32 %v473, %v495
        %497 = vmatmul.f32.gmra.mxu0 %v422
        %v498 = vpop.f32.mrf.mxu0
        %v499 = vadd.f32 %v476, %v498
        %500 = vdwg.mxu0
        %v501 = vadd.f32 %v417, %v496
        %v502 = vadd.f32 %v418, %v499
        %503 = vst [vmem:[#allocation2] sm:$0xff] %v501
        %504 = vst [vmem:[#allocation2 + $0x8] sm:$0xff] %v502
        // Predicated region
        $region75: #{fourier_linear_forward.1} parent=65 // pred_check
          %p505 = pneg %p411
        $region76: #{fourier_linear_forward.1} parent=65 // pred_check_branch
          %507 = sbr.rel (%p505) target = $region78
        $region77: #{fourier_linear_forward.1} parent=65 // pred_region
          %v508 = vld [vmem:[#allocation2] sm:$0xff]
          %v509 = vld [vmem:[#allocation2 + $0x8] sm:$0xff]
          %v510 = vld [vmem:[%s409] sm:$0x1]
          %v512 = vperm.slane %v510, 0
          %v514 = vadd.f32 %v508, %v512
          %v515 = vadd.f32 %v509, %v512
          %516 = vst [vmem:[%s393] sm:$0xff] %v514
          %517 = vst [vmem:[%s393 + $0x8] sm:$0xff] %v515
        $region78: #{fourier_linear_forward.1} parent=65 // pred_fallthru
          _
        %s518 = sand.u32 %s128, 1
        %s519 = scalar_lea.sflag [#allocation5], %s518
        %s520 = sand.u32 %s128, 1
        %s521 = smul.addr %s520, 16
        %s522 = scalar_lea.vmem [#allocation4], %s521
        // Predicated region
        $region79: #{fourier_linear_forward.1} parent=65 // pred_check
          %p523 = pneg %p138
        $region80: #{fourier_linear_forward.1} parent=65 // pred_check_branch
          %525 = sbr.rel (%p523) target = $region82
        $region81: #{fourier_linear_forward.1} parent=65 // pred_region
          %s526 = smul.u32 2, %s22
          %528 = vsyncadd %s519, 0
          %s529 = smul.addr %s526, 2
          %s530 = sadd.s32 %s23, %s529
          %s531 = smul.addr %s530, 8
          %s532 = scalar_lea.hbm %s3, %s531
          %s533 = sshll.u32 %s522, 4
          %s534 = int_to_ptr.vmem [resolvable:$true] %s533
          %s535 = sshll.u32 %s532, 4
          %s536 = int_to_ptr.hbm [resolvable:$true] %s535
          %541 = dma.vmem_to_hbm [thread:$0]  %s534, 256, %s536, %s519, 128, 256, 8
        $region82: #{fourier_linear_forward.1} parent=65 // pred_fallthru
          _
      $region66: #{fourier_linear_forward.1} parent=5 // pred_fallthru
        _
      %p542 = scmp.le.s32.totalorder 2, %s12
      // Predicated region
      $region83: #{fourier_linear_forward.1} parent=5 // pred_check
        %p543 = pneg %p542
      $region84: #{fourier_linear_forward.1} parent=5 // pred_check_branch
        %545 = sbr.rel (%p543) target = $region86
      $region85: #{fourier_linear_forward.1} parent=5 // pred_region
        %s546 = ssub.s32 %s12, 2
        // Predicated region
        $region87: #{fourier_linear_forward.1} parent=85 // pred_check
          %p547 = pneg %p144
        $region88: #{fourier_linear_forward.1} parent=85 // pred_check_branch
          %549 = sbr.rel (%p547) target = $region90
        $region89: #{fourier_linear_forward.1} parent=85 // pred_region
          %s550 = sand.u32 %s129, 1
          %s551 = scalar_lea.sflag [#allocation5], %s550
          %s552 = sand.u32 %s129, 1
          %s553 = smul.addr %s552, 16
          %s554 = scalar_lea.vmem [#allocation4], %s553
          %556 = dma.done %s551, 256
        $region90: #{fourier_linear_forward.1} parent=85 // pred_fallthru
          _
      $region86: #{fourier_linear_forward.1} parent=5 // pred_fallthru
        _
    $region6: #{fourier_linear_forward.1} parent=1 // loop_footer
      %s16 = sadd.s32 1, %s12
    $region7: #{fourier_linear_forward.1} parent=1 // loop_footer_branch
      %11 = sbr.rel target = $region3
    $region8: #{fourier_linear_forward.1} parent=1 // loop_exit
      _
    %557 = vsyncpa [#allocation5], 1
    %s558 = scalar_lea.sflag [#allocation5], 1
    %559 = vsyncpa %s558, 1

</llo_original>
